<compile_context>
chip_gen: v7x
topology: tpu7x:2x2x1
jax: 0.10.0
libtpu: 0.0.40
codegen_flags: <defaults>
</compile_context>

<pallas_src>
import functools

import jax
import jax.numpy as jnp
import numpy as np
from jax.experimental import pallas as pl
from jax.experimental.pallas import tpu as pltpu

_SUBLANES = 8
_LANES = 128
# ~512K f32 elements per (TH, W) tile  => 2 MiB per pipeline buffer; with 3 inputs
# x 2 buffers that is 12 MiB, comfortably inside v7x's VMEM and the raised limit.
_TILE_ELEMS = 512 * 1024
# Raise v5e's 16 MiB scoped-VMEM default; equal to the v6e/v7x defaults (safe everywhere).
_VMEM_LIMIT = 32 * 1024 * 1024


def _compiler_params(n_grid_axes):
    return pltpu.CompilerParams(
        dimension_semantics=("parallel",) * n_grid_axes,
        vmem_limit_bytes=_VMEM_LIMIT,
    )


def _pick_tile_rows(H, W):
    """Largest row-tile that keeps the (TH, W) fp32 working set within budget."""
    budget_rows = max(8, _TILE_ELEMS // max(int(W), 1))
    if H <= budget_rows:
        return H                      # whole image in one tile -> fused single pass
    return max(8, (budget_rows // 8) * 8)


def _scalars_to_tile(vals, shape):
    """Pack scalar vals[i] (broadcast across lanes) into sublane i of one lane-dense tile."""
    sub = jax.lax.broadcasted_iota(jnp.int32, shape, len(shape) - 2)
    tile = jnp.zeros(shape, jnp.float32)
    for i, v in enumerate(vals):
        tile = jnp.where(sub == i, jnp.asarray(v, jnp.float32), tile)
    return tile


def _row_valid_mask(tile_rows, width, total_rows):
    """Boolean (tile_rows, width) mask of rows that are inside the real image."""
    row0 = pl.program_id(1) * tile_rows
    rows = row0 + jax.lax.broadcasted_iota(jnp.int32, (tile_rows, width), 0)
    return rows < total_rows


def _solve_scale_shift(a00, a01, a11, b0, b1):
    """2x2 normal-equation solve; (0, 0) when det <= 0 (matches the PyTorch reference)."""
    det = a00 * a11 - a01 * a01
    valid = det > 0.0
    safe_det = jnp.where(valid, det, 1.0)
    scale = jnp.where(valid, (a11 * b0 - a01 * b1) / safe_det, 0.0)
    shift = jnp.where(valid, (a00 * b1 - a01 * b0) / safe_det, 0.0)
    return scale, shift


# ----------------------------------------------------------------------------
# Fused single-pass kernels (whole (H, W) image is one tile): one HBM read.
# ----------------------------------------------------------------------------
def _fused_masked_kernel(p_ref, t_ref, m_ref, out_ref):
    p = p_ref[0].astype(jnp.float32)
    t = t_ref[0].astype(jnp.float32)
    m = m_ref[0].astype(jnp.float32)
    mp = m * p
    a00 = jnp.sum(mp * p)
    a01 = jnp.sum(mp)
    a11 = jnp.sum(m)
    b0 = jnp.sum(mp * t)
    b1 = jnp.sum(m * t)
    scale, shift = _solve_scale_shift(a00, a01, a11, b0, b1)
    num = jnp.sum(m * jnp.abs(scale * p + shift - t))
    out_ref[...] = _scalars_to_tile((scale, shift, num, a11), out_ref.shape)


def _fused_unmasked_kernel(p_ref, t_ref, out_ref, *, hw):
    p = p_ref[0].astype(jnp.float32)
    t = t_ref[0].astype(jnp.float32)
    a00 = jnp.sum(p * p)
    a01 = jnp.sum(p)
    a11 = jnp.float32(hw)            # static: mask=None never streams a ones-mask
    b0 = jnp.sum(p * t)
    b1 = jnp.sum(t)
    scale, shift = _solve_scale_shift(a00, a01, a11, b0, b1)
    num = jnp.sum(jnp.abs(scale * p + shift - t))
    out_ref[...] = _scalars_to_tile((scale, shift, num, a11), out_ref.shape)


# ----------------------------------------------------------------------------
# Tiled pass A: per-(batch, H-tile) partial normal-equation sums.
# ----------------------------------------------------------------------------
def _sums_masked_kernel(p_ref, t_ref, m_ref, out_ref, *, tile_rows, width, total_rows):
    valid = _row_valid_mask(tile_rows, width, total_rows)
    p = jnp.where(valid, p_ref[0].astype(jnp.float32), 0.0)
    t = jnp.where(valid, t_ref[0].astype(jnp.float32), 0.0)
    m = jnp.where(valid, m_ref[0].astype(jnp.float32), 0.0)
    mp = m * p
    a00 = jnp.sum(mp * p)
    a01 = jnp.sum(mp)
    a11 = jnp.sum(m)
    b0 = jnp.sum(mp * t)
    b1 = jnp.sum(m * t)
    out_ref[...] = _scalars_to_tile((a00, a01, a11, b0, b1), out_ref.shape)


def _sums_unmasked_kernel(p_ref, t_ref, out_ref, *, tile_rows, width, total_rows):
    valid = _row_valid_mask(tile_rows, width, total_rows)
    p = jnp.where(valid, p_ref[0].astype(jnp.float32), 0.0)
    t = jnp.where(valid, t_ref[0].astype(jnp.float32), 0.0)
    a00 = jnp.sum(p * p)
    a01 = jnp.sum(p)
    b0 = jnp.sum(p * t)
    b1 = jnp.sum(t)
    out_ref[...] = _scalars_to_tile((a00, a01, b0, b1), out_ref.shape)


# ----------------------------------------------------------------------------
# Tiled pass B: per-(batch, H-tile) partial masked-L1 sums, scale/shift via
# scalar prefetch (SMEM).
# ----------------------------------------------------------------------------
def _l1_masked_kernel(scale_ref, shift_ref, p_ref, t_ref, m_ref, out_ref, *,
                      tile_rows, width, total_rows):
    b = pl.program_id(0)
    scale = scale_ref[b]
    shift = shift_ref[b]
    valid = _row_valid_mask(tile_rows, width, total_rows)
    p = p_ref[0].astype(jnp.float32)
    t = t_ref[0].astype(jnp.float32)
    m = m_ref[0].astype(jnp.float32)
    err = m * jnp.abs(scale * p + shift - t)
    num = jnp.sum(jnp.where(valid, err, 0.0))
    out_ref[...] = _scalars_to_tile((num,), out_ref.shape)


def _l1_unmasked_kernel(scale_ref, shift_ref, p_ref, t_ref, out_ref, *,
                        tile_rows, width, total_rows):
    b = pl.program_id(0)
    scale = scale_ref[b]
    shift = shift_ref[b]
    valid = _row_valid_mask(tile_rows, width, total_rows)
    p = p_ref[0].astype(jnp.float32)
    t = t_ref[0].astype(jnp.float32)
    err = jnp.abs(scale * p + shift - t)
    num = jnp.sum(jnp.where(valid, err, 0.0))
    out_ref[...] = _scalars_to_tile((num,), out_ref.shape)


# ----------------------------------------------------------------------------
# Orchestration
# ----------------------------------------------------------------------------
def _ssi_fused(p, t, m):
    B, H, W = p.shape
    in_spec = pl.BlockSpec((1, H, W), lambda b: (b, 0, 0))
    out_spec = pl.BlockSpec((1, _SUBLANES, _LANES), lambda b: (b, 0, 0))
    out_shape = jax.ShapeDtypeStruct((B, _SUBLANES, _LANES), jnp.float32)

    if m is None:
        kernel = functools.partial(_fused_unmasked_kernel, hw=H * W)
        inputs = (p, t)
    else:
        kernel = _fused_masked_kernel
        inputs = (p, t, m)

    out = pl.pallas_call(
        kernel,
        out_shape=out_shape,
        grid_spec=pltpu.PrefetchScalarGridSpec(
            num_scalar_prefetch=0,
            grid=(B,),
            in_specs=[in_spec] * len(inputs),
            out_specs=out_spec,
        ),
        compiler_params=_compiler_params(1),
    )(*inputs)

    scale = out[:, 0, 0]
    shift = out[:, 1, 0]
    num = out[:, 2, 0]
    den = out[:, 3, 0]
    return num, den, scale, shift


def _ssi_tiled(p, t, m, tile_rows):
    B, H, W = p.shape
    n_th = pl.cdiv(H, tile_rows)
    static = dict(tile_rows=tile_rows, width=W, total_rows=H)
    part_shape = jax.ShapeDtypeStruct((B, n_th, _SUBLANES, _LANES), jnp.float32)

    # ---- pass A: partial normal-equation sums ----
    in_spec = pl.BlockSpec((1, tile_rows, W), lambda b, h: (b, h, 0))
    out_spec = pl.BlockSpec((1, 1, _SUBLANES, _LANES), lambda b, h: (b, h, 0, 0))
    if m is None:
        kernel = functools.partial(_sums_unmasked_kernel, **static)
        inputs = (p, t)
    else:
        kernel = functools.partial(_sums_masked_kernel, **static)
        inputs = (p, t, m)

    sums = pl.pallas_call(
        kernel,
        out_shape=part_shape,
        grid_spec=pltpu.PrefetchScalarGridSpec(
            num_scalar_prefetch=0,
            grid=(B, n_th),
            in_specs=[in_spec] * len(inputs),
            out_specs=out_spec,
        ),
        compiler_params=_compiler_params(2),
    )(*inputs)

    if m is None:
        a00, a01, b0, b1 = (jnp.sum(sums[:, :, i, 0], axis=1) for i in range(4))
        a11 = jnp.full((B,), float(H * W), jnp.float32)
    else:
        a00, a01, a11, b0, b1 = (jnp.sum(sums[:, :, i, 0], axis=1) for i in range(5))

    scale, shift = _solve_scale_shift(a00, a01, a11, b0, b1)

    # ---- pass B: partial masked L1 with the solved (scale, shift) ----
    in_spec2 = pl.BlockSpec((1, tile_rows, W), lambda b, h, sc, sh: (b, h, 0))
    out_spec2 = pl.BlockSpec((1, 1, _SUBLANES, _LANES), lambda b, h, sc, sh: (b, h, 0, 0))
    if m is None:
        kernel = functools.partial(_l1_unmasked_kernel, **static)
        inputs = (p, t)
    else:
        kernel = functools.partial(_l1_masked_kernel, **static)
        inputs = (p, t, m)

    nums = pl.pallas_call(
        kernel,
        out_shape=part_shape,
        grid_spec=pltpu.PrefetchScalarGridSpec(
            num_scalar_prefetch=2,
            grid=(B, n_th),
            in_specs=[in_spec2] * len(inputs),
            out_specs=out_spec2,
        ),
        compiler_params=_compiler_params(2),
    )(scale.astype(jnp.float32), shift.astype(jnp.float32), *inputs)

    num = jnp.sum(nums[:, :, 0, 0], axis=1)
    return num, a11, scale, shift


def scale_and_shift_invariant_loss(prediction, target, mask=None, interpolate=True,
                                   return_interpolated=False, tile_rows=None):
    """Mirrors ScaleAndShiftInvariantLoss.forward for matching-resolution NCHW inputs.

    Returns (loss, scale, shift).
    """
    del interpolate, return_interpolated  # module returns the same tuple either way
    # TODO(synk): bilinear align_corners=True interpolation branch (prediction/target
    # spatial-shape mismatch) is not implemented; inputs must share spatial shape.
    assert prediction.shape[-2:] == target.shape[-2:], (
        "prediction/target must share spatial shape (no interpolation path)")

    # squeeze().unsqueeze(0) as in the PyTorch module -> (1, H, W) for (1,1,H,W) inputs.
    p = jnp.expand_dims(jnp.squeeze(prediction), 0)
    t = jnp.expand_dims(jnp.squeeze(target), 0)
    assert p.ndim == 3, "kernel expects (B, H, W) after squeeze/unsqueeze (as in PyTorch ref)"
    assert p.shape == t.shape, f"Shape mismatch: {p.shape} vs {t.shape}"

    if mask is None:
        m = None
    else:
        m = jnp.expand_dims(jnp.squeeze(mask), 0)
        if not jnp.issubdtype(m.dtype, jnp.floating):
            m = m.astype(jnp.float32)
        assert m.shape == p.shape, f"Mask shape mismatch: {m.shape} vs {p.shape}"

    B, H, W = p.shape
    if tile_rows is None:
        tile_rows = _pick_tile_rows(H, W)

    if tile_rows >= H:
        num, den, scale, shift = _ssi_fused(p, t, m)
    else:
        assert tile_rows % 8 == 0, "tile_rows must be a multiple of 8"
        num, den, scale, shift = _ssi_tiled(p, t, m, tile_rows)

    total_num = jnp.sum(num)
    total_den = jnp.sum(den)
    safe_den = jnp.where(total_den > 0, total_den, 1.0)   # guard all-zero mask
    loss = jnp.where(total_den > 0, total_num / safe_den, 0.0)
    return loss, scale, shift


# ----------------------------------------------------------------------------
# Pure-JAX reference (matches the PyTorch module, no interpolation path)
# ----------------------------------------------------------------------------
def _reference(prediction, target, mask=None):
    p = jnp.expand_dims(jnp.squeeze(prediction), 0).astype(jnp.float32)
    t = jnp.expand_dims(jnp.squeeze(target), 0).astype(jnp.float32)
    m = (jnp.ones_like(t) if mask is None
         else jnp.expand_dims(jnp.squeeze(mask), 0).astype(jnp.float32))

    a_00 = jnp.sum(m * p * p, axis=(1, 2))
    a_01 = jnp.sum(m * p, axis=(1, 2))
    a_11 = jnp.sum(m, axis=(1, 2))
    b_0 = jnp.sum(m * p * t, axis=(1, 2))
    b_1 = jnp.sum(m * t, axis=(1, 2))
    det = a_00 * a_11 - a_01 * a_01
    valid = det > 0
    sdet = jnp.where(valid, det, 1.0)
    x_0 = jnp.where(valid, (a_11 * b_0 - a_01 * b_1) / sdet, 0.0)
    x_1 = jnp.where(valid, (-a_01 * b_0 + a_00 * b_1) / sdet, 0.0)
    scaled = x_0[:, None, None] * p + x_1[:, None, None]
    loss = jnp.sum(m * jnp.abs(scaled - t)) / jnp.sum(m)
    return loss, x_0, x_1


if __name__ == "__main__":
    key = jax.random.PRNGKey(0)
    k1, k2, k3 = jax.random.split(key, 3)

    def check(pred, targ, msk, tile_rows=None):
        out = scale_and_shift_invariant_loss(pred, targ, mask=msk, tile_rows=tile_rows)
        jax.block_until_ready(out)
        ref = _reference(pred, targ, msk)
        for got, want in zip(out, ref):
            np.testing.assert_allclose(np.asarray(got), np.asarray(want),
                                       rtol=1e-3, atol=1e-4)

    # --- fused single-pass path (image fits one tile) ---
    B, C, H, W = 1, 1, 16, 128
    pred = jax.random.normal(k1, (B, C, H, W), dtype=jnp.float32)
    targ = 2.5 * pred + 0.7 + 0.1 * jax.random.normal(k2, (B, C, H, W), jnp.float32)
    msk = (jax.random.uniform(k3, (B, C, H, W)) > 0.3).astype(jnp.float32)
    check(pred, targ, None)        # mask=None specialization (2 streamed inputs)
    check(pred, targ, msk)         # masked path

    # --- tiled two-pass path, forced small tile; last H-tile is partial (40 % 16 != 0) ---
    H2 = 40
    pred2 = jax.random.normal(k1, (B, C, H2, W), dtype=jnp.float32)
    targ2 = 1.7 * pred2 - 0.3 + 0.05 * jax.random.normal(k2, (B, C, H2, W), jnp.float32)
    msk2 = (jax.random.uniform(k3, (B, C, H2, W)) > 0.4).astype(jnp.float32)
    check(pred2, targ2, None, tile_rows=16)
    check(pred2, targ2, msk2, tile_rows=16)

    print("KERNEL_OK")
</pallas_src>

<mosaic_0001>
module attributes {stable_mosaic.version = 11 : i64} {
  func.func @_fused_unmasked_kernel(%arg0: i32, %arg1: memref<1x16x128xf32, #tpu.memory_space<vmem>>, %arg2: memref<1x16x128xf32, #tpu.memory_space<vmem>>, %arg3: memref<1x8x128xf32, #tpu.memory_space<vmem>>) attributes {dimension_semantics = [#tpu.dimension_semantics<parallel>], iteration_bounds = array<i64: 1>, scalar_prefetch = 0 : i64, scratch_operands = 0 : i64, tpu.core_type = #tpu.core_type<tc>, window_params = [{transform_indices = @transform_0, window_bounds = array<i64: 1, 16, 128>}, {transform_indices = @transform_1, window_bounds = array<i64: 1, 16, 128>}, {transform_indices = @transform_2, window_bounds = array<i64: 1, 8, 128>}]} {
    %c0 = arith.constant 0 : index
    %c0_0 = arith.constant 0 : index
    %c0_1 = arith.constant 0 : index
    %0 = vector.load %arg1[%c0, %c0_0, %c0_1] : memref<1x16x128xf32, #tpu.memory_space<vmem>>, vector<1x16x128xf32>
    %1 = vector.shape_cast %0 : vector<1x16x128xf32> to vector<16x128xf32>
    %c0_2 = arith.constant 0 : index
    %c0_3 = arith.constant 0 : index
    %c0_4 = arith.constant 0 : index
    %2 = vector.load %arg2[%c0_2, %c0_3, %c0_4] : memref<1x16x128xf32, #tpu.memory_space<vmem>>, vector<1x16x128xf32>
    %3 = vector.shape_cast %2 : vector<1x16x128xf32> to vector<16x128xf32>
    %4 = arith.mulf %1, %1 : vector<16x128xf32>
    %5 = vector.shape_cast %4 : vector<16x128xf32> to vector<1x16x128xf32>
    %cst = arith.constant dense<0.000000e+00> : vector<1xf32>
    %6 = vector.multi_reduction <add>, %5, %cst [1, 2] : vector<1x16x128xf32> to vector<1xf32>
    %7 = vector.shape_cast %6 : vector<1xf32> to vector<1x1x1xf32>
    %8 = vector.extract %7[0, 0, 0] : f32 from vector<1x1x1xf32>
    %9 = vector.shape_cast %1 : vector<16x128xf32> to vector<1x16x128xf32>
    %cst_5 = arith.constant dense<0.000000e+00> : vector<1xf32>
    %10 = vector.multi_reduction <add>, %9, %cst_5 [1, 2] : vector<1x16x128xf32> to vector<1xf32>
    %11 = vector.shape_cast %10 : vector<1xf32> to vector<1x1x1xf32>
    %12 = vector.extract %11[0, 0, 0] : f32 from vector<1x1x1xf32>
    %13 = arith.mulf %1, %3 : vector<16x128xf32>
    %14 = vector.shape_cast %13 : vector<16x128xf32> to vector<1x16x128xf32>
    %cst_6 = arith.constant dense<0.000000e+00> : vector<1xf32>
    %15 = vector.multi_reduction <add>, %14, %cst_6 [1, 2] : vector<1x16x128xf32> to vector<1xf32>
    %16 = vector.shape_cast %15 : vector<1xf32> to vector<1x1x1xf32>
    %17 = vector.extract %16[0, 0, 0] : f32 from vector<1x1x1xf32>
    %18 = vector.shape_cast %3 : vector<16x128xf32> to vector<1x16x128xf32>
    %cst_7 = arith.constant dense<0.000000e+00> : vector<1xf32>
    %19 = vector.multi_reduction <add>, %18, %cst_7 [1, 2] : vector<1x16x128xf32> to vector<1xf32>
    %20 = vector.shape_cast %19 : vector<1xf32> to vector<1x1x1xf32>
    %21 = vector.extract %20[0, 0, 0] : f32 from vector<1x1x1xf32>
    %cst_8 = arith.constant 2.048000e+03 : f32
    %22 = arith.mulf %8, %cst_8 : f32
    %23 = arith.mulf %12, %12 : f32
    %24 = arith.subf %22, %23 : f32
    %cst_9 = arith.constant 0.000000e+00 : f32
    %25 = arith.cmpf ogt, %24, %cst_9 : f32
    %cst_10 = arith.constant 1.000000e+00 : f32
    %26 = arith.select %25, %24, %cst_10 : f32
    %cst_11 = arith.constant 2.048000e+03 : f32
    %27 = arith.mulf %cst_11, %17 : f32
    %28 = arith.mulf %12, %21 : f32
    %29 = arith.subf %27, %28 : f32
    %30 = arith.divf %29, %26 : f32
    %cst_12 = arith.constant 0.000000e+00 : f32
    %31 = arith.select %25, %30, %cst_12 : f32
    %32 = arith.mulf %8, %21 : f32
    %33 = arith.mulf %12, %17 : f32
    %34 = arith.subf %32, %33 : f32
    %35 = arith.divf %34, %26 : f32
    %cst_13 = arith.constant 0.000000e+00 : f32
    %36 = arith.select %25, %35, %cst_13 : f32
    %37 = vector.broadcast %31 : f32 to vector<16x128xf32>
    %38 = arith.mulf %37, %1 : vector<16x128xf32>
    %39 = vector.broadcast %36 : f32 to vector<16x128xf32>
    %40 = arith.addf %38, %39 : vector<16x128xf32>
    %41 = arith.subf %40, %3 : vector<16x128xf32>
    %42 = math.absf %41 : vector<16x128xf32>
    %43 = vector.shape_cast %42 : vector<16x128xf32> to vector<1x16x128xf32>
    %cst_14 = arith.constant dense<0.000000e+00> : vector<1xf32>
    %44 = vector.multi_reduction <add>, %43, %cst_14 [1, 2] : vector<1x16x128xf32> to vector<1xf32>
    %45 = vector.shape_cast %44 : vector<1xf32> to vector<1x1x1xf32>
    %46 = vector.extract %45[0, 0, 0] : f32 from vector<1x1x1xf32>
    %47 = tpu.iota {dimensions = array<i32: 1>} : vector<1x8x128xi32>
    %cst_15 = arith.constant 0.000000e+00 : f32
    %48 = vector.broadcast %cst_15 : f32 to vector<1x8x128xf32>
    %c0_i32 = arith.constant 0 : i32
    %49 = vector.broadcast %c0_i32 : i32 to vector<1x8x128xi32>
    %50 = arith.cmpi eq, %47, %49 : vector<1x8x128xi32>
    %51 = vector.broadcast %31 : f32 to vector<1x8x128xf32>
    %52 = arith.select %50, %51, %48 : vector<1x8x128xi1>, vector<1x8x128xf32>
    %c1_i32 = arith.constant 1 : i32
    %53 = vector.broadcast %c1_i32 : i32 to vector<1x8x128xi32>
    %54 = arith.cmpi eq, %47, %53 : vector<1x8x128xi32>
    %55 = vector.broadcast %36 : f32 to vector<1x8x128xf32>
    %56 = arith.select %54, %55, %52 : vector<1x8x128xi1>, vector<1x8x128xf32>
    %c2_i32 = arith.constant 2 : i32
    %57 = vector.broadcast %c2_i32 : i32 to vector<1x8x128xi32>
    %58 = arith.cmpi eq, %47, %57 : vector<1x8x128xi32>
    %59 = vector.broadcast %46 : f32 to vector<1x8x128xf32>
    %60 = arith.select %58, %59, %56 : vector<1x8x128xi1>, vector<1x8x128xf32>
    %c3_i32 = arith.constant 3 : i32
    %61 = vector.broadcast %c3_i32 : i32 to vector<1x8x128xi32>
    %62 = arith.cmpi eq, %47, %61 : vector<1x8x128xi32>
    %cst_16 = arith.constant 2.048000e+03 : f32
    %63 = vector.broadcast %cst_16 : f32 to vector<1x8x128xf32>
    %64 = arith.select %62, %63, %60 : vector<1x8x128xi1>, vector<1x8x128xf32>
    %c0_17 = arith.constant 0 : index
    %c0_18 = arith.constant 0 : index
    %c0_19 = arith.constant 0 : index
    %65 = vector.load %arg3[%c0_17, %c0_18, %c0_19] : memref<1x8x128xf32, #tpu.memory_space<vmem>>, vector<1x8x128xf32>
    tpu.vector_store %arg3[%c0_17, %c0_18, %c0_19], %64 {strides = array<i32>} : memref<1x8x128xf32, #tpu.memory_space<vmem>>, vector<1x8x128xf32>,
    return
  }
  func.func @transform_0(%arg0: i32) -> (i32, i32, i32) {
    %c0_i32 = arith.constant 0 : i32
    %c0_i32_0 = arith.constant 0 : i32
    %c0_i32_1 = arith.constant 0 : i32
    return %arg0, %c0_i32, %c0_i32_0 : i32, i32, i32
  }
  func.func @transform_1(%arg0: i32) -> (i32, i32, i32) {
    %c0_i32 = arith.constant 0 : i32
    %c0_i32_0 = arith.constant 0 : i32
    %c0_i32_1 = arith.constant 0 : i32
    return %arg0, %c0_i32, %c0_i32_0 : i32, i32, i32
  }
  func.func @transform_2(%arg0: i32) -> (i32, i32, i32) {
    %c0_i32 = arith.constant 0 : i32
    %c0_i32_0 = arith.constant 0 : i32
    %c0_i32_1 = arith.constant 0 : i32
    return %arg0, %c0_i32, %c0_i32_0 : i32, i32, i32
  }
}

</mosaic_0001>

<llo_original>
// kernel: tpu_custom_call.1
$region0: #{tpu_custom_call.1}
  #allocation0 [shape = 'u32[]', space=smem, size = 0x4, offset = 0x4, fixed_abs, tag = 'smem constant byte address 0x4 - core index']
  #allocation1 [shape = 'u32[144,128]{1,0:T(1,128)}', space=vmem, size = 0x12000, scoped, tag = 'internal scratch']
  %s0 = inlined_call_operand.hbm [shape: f32[1,16,128], index: 0, kind: input, shape index: {}]
  %s1 = inlined_call_operand.hbm [shape: f32[1,16,128], index: 1, kind: input, shape index: {}]
  %s2 = inlined_call_operand.hbm [shape: f32[1,8,128], index: 2, kind: output, shape index: {}]
  %s3 = sld [smem:[#allocation0]]
  $region26: #{tpu_custom_call.1} parent=0
    _
  %s5 = ssub.s32 1, %s3
  %s6 = scalar_select 0, %s5, %s3
  $region1: #{tpu_custom_call.1} parent=0
    #allocation2 [shape = 'u8[8192]{0}', space=vmem, size = 0x2000, scoped, tag = 'input window, operand 0, single buffered']
    #allocation3 [shape = 's32[1]{0}', space=sflag, size = 0x4, scoped, tag = 'scoped memory for tpu_custom_call.1']
    #allocation4 [shape = 's32[1]{0}', space=sflag, size = 0x4, scoped, tag = 'scoped memory for tpu_custom_call.1']
    #allocation5 [shape = 'u8[8192]{0}', space=vmem, size = 0x2000, scoped, tag = 'input window, operand 1, single buffered']
    #allocation6 [shape = 's32[1]{0}', space=sflag, size = 0x4, scoped, tag = 'scoped memory for tpu_custom_call.1']
    #allocation7 [shape = 'u8[4096]{0}', space=vmem, size = 0x1000, scoped, tag = 'output window, operand 0, single buffered']
    %7 = vsyncpa [#allocation3], 0
    %8 = vsyncpa [#allocation6], 0
    %9 = vsyncpa [#allocation4], 0
    // Predicated region
    $region2: #{tpu_custom_call.1} parent=1 // pred_check
      _
    $region3: #{tpu_custom_call.1} parent=1 // pred_check_branch
      %11 = sbr.rel (0) target = $region5
    $region4: #{tpu_custom_call.1} parent=1 // pred_region
      %s13 = ssub.s32 256, 256
      %14 = vsyncadd [#allocation3], %s13
      %s15 = sshll.u32 [#allocation2], 4
      %s16 = int_to_ptr.vmem [resolvable:$true] %s15
      %21 = dma.hbm_to_vmem [thread:$0]  %s0, 256, %s16, [#allocation3], 128, 128, 8
    $region5: #{tpu_custom_call.1} parent=1 // pred_fallthru
      _
    // Predicated region
    $region6: #{tpu_custom_call.1} parent=1 // pred_check
      _
    $region7: #{tpu_custom_call.1} parent=1 // pred_check_branch
      %23 = sbr.rel (0) target = $region9
    $region8: #{tpu_custom_call.1} parent=1 // pred_region
      %s25 = ssub.s32 256, 256
      %26 = vsyncadd [#allocation6], %s25
      %s27 = sshll.u32 [#allocation5], 4
      %s28 = int_to_ptr.vmem [resolvable:$true] %s27
      %33 = dma.hbm_to_vmem [thread:$0]  %s1, 256, %s28, [#allocation6], 128, 128, 8
    $region9: #{tpu_custom_call.1} parent=1 // pred_fallthru
      _
    // Predicated region
    $region10: #{tpu_custom_call.1} parent=1 // pred_check
      _
    $region11: #{tpu_custom_call.1} parent=1 // pred_check_branch
      %35 = sbr.rel (0) target = $region13
    $region12: #{tpu_custom_call.1} parent=1 // pred_region
      %36 = dma.done [#allocation3], 256
    $region13: #{tpu_custom_call.1} parent=1 // pred_fallthru
      _
    // Predicated region
    $region14: #{tpu_custom_call.1} parent=1 // pred_check
      _
    $region15: #{tpu_custom_call.1} parent=1 // pred_check_branch
      %38 = sbr.rel (0) target = $region17
    $region16: #{tpu_custom_call.1} parent=1 // pred_region
      %39 = dma.done [#allocation6], 256
    $region17: #{tpu_custom_call.1} parent=1 // pred_fallthru
      _
    %v40 = vld [vmem:[#allocation2] sm:$0xff]
    %v41 = vld [vmem:[#allocation2 + $0x8] sm:$0xff]
    %v42 = vld [vmem:[#allocation5] sm:$0xff]
    %v43 = vld [vmem:[#allocation5 + $0x8] sm:$0xff]
    %v44 = vmul.f32 %v40, %v40
    %v45 = vmul.f32 %v41, %v41
    %v46 = vadd.f32 %v44, %v45
    %47 = vadd.xlane.f32.xlu0 %v46
    %v48 = vpop.xlane.xlu0 %47
    %v49 = vrot.slane %v48, 4
    %v50 = vadd.f32 %v48, %v49
    %v51 = vrot.slane %v50, 2
    %v52 = vadd.f32 %v50, %v51
    %v53 = vrot.slane %v52, 1
    %v54 = vadd.f32 %v52, %v53
    %s55 = vtos %v54
    %v56 = vadd.f32 %v40, %v41
    %57 = vadd.xlane.f32.xlu0 %v56
    %v58 = vpop.xlane.xlu0 %57
    %v59 = vrot.slane %v58, 4
    %v60 = vadd.f32 %v58, %v59
    %v61 = vrot.slane %v60, 2
    %v62 = vadd.f32 %v60, %v61
    %v63 = vrot.slane %v62, 1
    %v64 = vadd.f32 %v62, %v63
    %s65 = vtos %v64
    %v66 = vmul.f32 %v40, %v42
    %v67 = vmul.f32 %v41, %v43
    %v68 = vadd.f32 %v66, %v67
    %69 = vadd.xlane.f32.xlu0 %v68
    %v70 = vpop.xlane.xlu0 %69
    %v71 = vrot.slane %v70, 4
    %v72 = vadd.f32 %v70, %v71
    %v73 = vrot.slane %v72, 2
    %v74 = vadd.f32 %v72, %v73
    %v75 = vrot.slane %v74, 1
    %v76 = vadd.f32 %v74, %v75
    %s77 = vtos %v76
    %v78 = vadd.f32 %v42, %v43
    %79 = vadd.xlane.f32.xlu0 %v78
    %v80 = vpop.xlane.xlu0 %79
    %v81 = vrot.slane %v80, 4
    %v82 = vadd.f32 %v80, %v81
    %v83 = vrot.slane %v82, 2
    %v84 = vadd.f32 %v82, %v83
    %v85 = vrot.slane %v84, 1
    %v86 = vadd.f32 %v84, %v85
    %s87 = vtos %v86
    %s88 = smul.f32 %s55, 2048.0
    %s89 = smul.f32 %s65, %s65
    %s90 = ssub.f32 %s88, %s89
    %p91 = scmp.gt.f32.partialorder %s90, 0.0
    %s92 = scalar_select %p91, %s90, 1.0
    %s93 = smul.f32 %s77, 2048.0
    %s94 = smul.f32 %s65, %s87
    %s95 = ssub.f32 %s93, %s94
    %v96 = vstv %s92
    %v97 = vrcp.pop %v96
    %s98 = vtos %v97
    %s99 = smul.f32 %s95, %s98
    %s100 = scalar_select %p91, %s99, 0.0
    %s101 = smul.f32 %s55, %s87
    %s102 = smul.f32 %s65, %s77
    %s103 = ssub.f32 %s101, %s102
    %v104 = vstv %s92
    %v105 = vrcp.pop %v104
    %s106 = vtos %v105
    %s107 = smul.f32 %s103, %s106
    %s108 = scalar_select %p91, %s107, 0.0
    %v109 = vstv %s100
    %v110 = vmul.f32 %v109, %v40
    %v111 = vmul.f32 %v109, %v41
    %v112 = vstv %s108
    %v113 = vadd.f32 %v110, %v112
    %v114 = vadd.f32 %v111, %v112
    %v115 = vsub.f32 %v113, %v42
    %v116 = vsub.f32 %v114, %v43
    %v117 = vand.u32 2147483647, %v115
    %v118 = vand.u32 2147483647, %v116
    %v119 = vadd.f32 %v117, %v118
    %120 = vadd.xlane.f32.xlu0 %v119
    %v121 = vpop.xlane.xlu0 %120
    %v122 = vrot.slane %v121, 4
    %v123 = vadd.f32 %v121, %v122
    %v124 = vrot.slane %v123, 2
    %v125 = vadd.f32 %v123, %v124
    %v126 = vrot.slane %v125, 1
    %v127 = vadd.f32 %v125, %v126
    %s128 = vtos %v127
    %v129 = vlaneseq
    %v130 = vshrl.u32 %v129, 7
    %vm131 = vcmp.eq.s32.totalorder %v130, 0
    %v132 = vsel %vm131, %v109, 0.0
    %vm133 = vcmp.eq.s32.totalorder %v130, 1
    %v134 = vsel %vm133, %v112, %v132
    %vm135 = vcmp.eq.s32.totalorder %v130, 2
    %v136 = vstv %s128
    %v137 = vsel %vm135, %v136, %v134
    %vm138 = vcmp.eq.s32.totalorder %v130, 3
    %v139 = vsel %vm138, 2048.0, %v137
    %140 = vst [vmem:[#allocation7] sm:$0xff] %v139
    // Predicated region
    $region18: #{tpu_custom_call.1} parent=1 // pred_check
      _
    $region19: #{tpu_custom_call.1} parent=1 // pred_check_branch
      %142 = sbr.rel (0) target = $region21
    $region20: #{tpu_custom_call.1} parent=1 // pred_region
      %s144 = ssub.s32 128, 128
      %145 = vsyncadd [#allocation4], %s144
      %s147 = sshll.u32 [#allocation7], 4
      %s148 = int_to_ptr.vmem [resolvable:$true] %s147
      %150 = dma.vmem_to_hbm [thread:$0]  %s148, 128, %s2, [#allocation4]
    $region21: #{tpu_custom_call.1} parent=1 // pred_fallthru
      _
    // Predicated region
    $region22: #{tpu_custom_call.1} parent=1 // pred_check
      _
    $region23: #{tpu_custom_call.1} parent=1 // pred_check_branch
      %152 = sbr.rel (0) target = $region25
    $region24: #{tpu_custom_call.1} parent=1 // pred_region
      %153 = dma.done [#allocation4], 128
    $region25: #{tpu_custom_call.1} parent=1 // pred_fallthru
      _
    %154 = vsyncpa [#allocation3], 1
    %155 = vsyncpa [#allocation6], 1
    %156 = vsyncpa [#allocation4], 1

</llo_original>
